<compile_context>
chip_gen: v5e
topology: v5e:2x2
jax: 0.10.0
libtpu: 0.0.40
codegen_flags: <defaults>
</compile_context>

<pallas_src>
import functools

import jax
import jax.numpy as jnp
from jax.experimental import pallas as pl
from jax.experimental.pallas import tpu as pltpu


def perceptron_kernel(x_ref,
                      w1_ref, b1_ref,
                      w2_ref, b2_ref,
                      w3_ref, b3_ref,
                      w4_ref, b4_ref,
                      o_ref):
    # MXU operands in bf16, accumulation + bias/tanh in f32.
    x = x_ref[...].astype(jnp.bfloat16)                                   # (TB, 11)

    h1 = jnp.dot(x, w1_ref[...], preferred_element_type=jnp.float32)     # (TB, 256)
    h1 = jnp.tanh(h1 + b1_ref[...])

    h2 = jnp.dot(h1.astype(jnp.bfloat16), w2_ref[...],
                 preferred_element_type=jnp.float32)                      # (TB, 128)
    h2 = jnp.tanh(h2 + b2_ref[...])

    h3 = jnp.dot(h2.astype(jnp.bfloat16), w3_ref[...],
                 preferred_element_type=jnp.float32)                      # (TB, 32)
    h3 = jnp.tanh(h3 + b3_ref[...])

    h4 = jnp.dot(h3.astype(jnp.bfloat16), w4_ref[...],
                 preferred_element_type=jnp.float32)                      # (TB, 11)
    o_ref[...] = (h4 + b4_ref[...]).astype(o_ref.dtype)                   # narrow (11-wide) store


def _round_up(n, m):
    return ((n + m - 1) // m) * m


@functools.partial(jax.jit, static_argnames=("tb_max",))
def perceptron_forward(x, params, *, tb_max=256):
    """x: (B, num_inputs) float32. params: dict of w1..w4 (in,out), b1..b4 (1,out)."""
    B, num_inputs = x.shape
    num_outputs = params["w4"].shape[1]

    # bf16 weights for the MXU; f32 biases for the VPU/EUP path.
    w1 = params["w1"].astype(jnp.bfloat16); b1 = params["b1"].astype(jnp.float32)
    w2 = params["w2"].astype(jnp.bfloat16); b2 = params["b2"].astype(jnp.float32)
    w3 = params["w3"].astype(jnp.bfloat16); b3 = params["b3"].astype(jnp.float32)
    w4 = params["w4"].astype(jnp.bfloat16); b4 = params["b4"].astype(jnp.float32)

    # Batch tile: multiple of 8, capped at tb_max (default 256) so batch-pad
    # waste is small and large batches give >=2 grid steps for the v7x
    # megacore split.  VMEM is not the limiter at this tile size.
    tb = min(tb_max, _round_up(B, 8))
    b_pad = _round_up(B, tb)

    x_f32 = x.astype(jnp.float32)
    if b_pad != B:
        x_f32 = jnp.pad(x_f32, ((0, b_pad - B), (0, 0)))   # pad batch rows only (columns stay at 11)

    grid = (b_pad // tb,)

    const = lambda a: pl.BlockSpec(a.shape, lambda i: (0, 0))  # weights/biases stay VMEM-resident

    h1_n, h2_n, h3_n = w1.shape[1], w2.shape[1], w3.shape[1]
    flops = 2 * b_pad * (num_inputs * h1_n + h1_n * h2_n + h2_n * h3_n + h3_n * num_outputs)
    transcendentals = b_pad * (h1_n + h2_n + h3_n)
    bytes_accessed = (4 * b_pad * (num_inputs + num_outputs)                       # x + out (f32)
                      + 2 * (w1.size + w2.size + w3.size + w4.size)                # bf16 weights
                      + 4 * (b1.size + b2.size + b3.size + b4.size))               # f32 biases

    out_padded = pl.pallas_call(
        perceptron_kernel,
        out_shape=jax.ShapeDtypeStruct((b_pad, num_outputs), jnp.float32),
        grid=grid,
        in_specs=[pl.BlockSpec((tb, num_inputs), lambda i: (i, 0)),
                  const(w1), const(b1),
                  const(w2), const(b2),
                  const(w3), const(b3),
                  const(w4), const(b4)],
        out_specs=pl.BlockSpec((tb, num_outputs), lambda i: (i, 0)),
        compiler_params=pltpu.CompilerParams(
            dimension_semantics=("parallel",)),   # shard batch steps across v7x TCs; no-op on v5e/v6e
        cost_estimate=pl.CostEstimate(flops=flops,
                                      transcendentals=transcendentals,
                                      bytes_accessed=bytes_accessed),
    )(x_f32, w1, b1, w2, b2, w3, b3, w4, b4)

    return out_padded[:B]


def init_linear(key, fan_in, fan_out):
    """Deterministic init mirroring nn.Linear default: U(-1/sqrt(fan_in), 1/sqrt(fan_in)).
    Returns W as (fan_in, fan_out) (already transposed) and b as (1, fan_out)."""
    kw, kb = jax.random.split(key)
    bound = 1.0 / jnp.sqrt(jnp.float32(fan_in))
    w = jax.random.uniform(kw, (fan_in, fan_out), jnp.float32, -bound, bound)
    b = jax.random.uniform(kb, (1, fan_out), jnp.float32, -bound, bound)
    return w, b


def make_params(key,
                num_inputs=11, num_hidden1=256, num_hidden2=128,
                num_hidden3=32, num_outputs=11):
    k1, k2, k3, k4 = jax.random.split(key, 4)
    w1, b1 = init_linear(k1, num_inputs, num_hidden1)
    w2, b2 = init_linear(k2, num_hidden1, num_hidden2)
    w3, b3 = init_linear(k3, num_hidden2, num_hidden3)
    w4, b4 = init_linear(k4, num_hidden3, num_outputs)
    return dict(w1=w1, b1=b1, w2=w2, b2=b2, w3=w3, b3=b3, w4=w4, b4=b4)


def reference_forward(x, p):
    h = jnp.tanh(x @ p["w1"] + p["b1"])
    h = jnp.tanh(h @ p["w2"] + p["b2"])
    h = jnp.tanh(h @ p["w3"] + p["b3"])
    return h @ p["w4"] + p["b4"]


if __name__ == "__main__":
    key = jax.random.PRNGKey(0)
    kx, kp = jax.random.split(key)
    params = make_params(kp)

    # (batch=24, tb_max=8) exercises a multi-step batch grid (grid=(3,));
    # (batch=10, tb_max=256) exercises ragged-batch zero padding (10 -> 16 rows).
    for batch, tb_max in ((24, 8), (10, 256)):
        x = jax.random.normal(jax.random.fold_in(kx, batch), (batch, 11), jnp.float32)
        out = jax.block_until_ready(perceptron_forward(x, params, tb_max=tb_max))
        ref = reference_forward(x, params)
        assert out.shape == ref.shape == (batch, 11), out.shape
        # bf16 MXU operands (f32 accumulation) -> small numeric delta vs f32 reference.
        assert jnp.allclose(out, ref, atol=3e-2, rtol=3e-2), "mismatch vs JAX reference"

    print("KERNEL_OK")
</pallas_src>

<mosaic_0001>
module attributes {stable_mosaic.version = 11 : i64} {
  func.func @perceptron_kernel(%arg0: i32, %arg1: memref<8x11xf32, #tpu.memory_space<vmem>>, %arg2: memref<11x256xbf16, #tpu.memory_space<vmem>>, %arg3: memref<1x256xf32, #tpu.memory_space<vmem>>, %arg4: memref<256x128xbf16, #tpu.memory_space<vmem>>, %arg5: memref<1x128xf32, #tpu.memory_space<vmem>>, %arg6: memref<128x32xbf16, #tpu.memory_space<vmem>>, %arg7: memref<1x32xf32, #tpu.memory_space<vmem>>, %arg8: memref<32x11xbf16, #tpu.memory_space<vmem>>, %arg9: memref<1x11xf32, #tpu.memory_space<vmem>>, %arg10: memref<8x11xf32, #tpu.memory_space<vmem>>) attributes {dimension_semantics = [#tpu.dimension_semantics<parallel>], iteration_bounds = array<i64: 3>, scalar_prefetch = 0 : i64, scratch_operands = 0 : i64, tpu.core_type = #tpu.core_type<tc>, window_params = [{transform_indices = @transform_0, window_bounds = array<i64: 8, 11>}, {pipeline_mode = #tpu.pipeline_mode<synchronous>, transform_indices = @transform_1, window_bounds = array<i64: 11, 256>}, {pipeline_mode = #tpu.pipeline_mode<synchronous>, transform_indices = @transform_2, window_bounds = array<i64: 1, 256>}, {pipeline_mode = #tpu.pipeline_mode<synchronous>, transform_indices = @transform_3, window_bounds = array<i64: 256, 128>}, {pipeline_mode = #tpu.pipeline_mode<synchronous>, transform_indices = @transform_4, window_bounds = array<i64: 1, 128>}, {pipeline_mode = #tpu.pipeline_mode<synchronous>, transform_indices = @transform_5, window_bounds = array<i64: 128, 32>}, {pipeline_mode = #tpu.pipeline_mode<synchronous>, transform_indices = @transform_6, window_bounds = array<i64: 1, 32>}, {pipeline_mode = #tpu.pipeline_mode<synchronous>, transform_indices = @transform_7, window_bounds = array<i64: 32, 11>}, {pipeline_mode = #tpu.pipeline_mode<synchronous>, transform_indices = @transform_8, window_bounds = array<i64: 1, 11>}, {transform_indices = @transform_9, window_bounds = array<i64: 8, 11>}]} {
    %c0 = arith.constant 0 : index
    %c0_0 = arith.constant 0 : index
    %0 = vector.load %arg1[%c0, %c0_0] : memref<8x11xf32, #tpu.memory_space<vmem>>, vector<8x11xf32>
    %1 = arith.truncf %0 : vector<8x11xf32> to vector<8x11xbf16>
    %c0_1 = arith.constant 0 : index
    %c0_2 = arith.constant 0 : index
    %2 = vector.load %arg2[%c0_1, %c0_2] : memref<11x256xbf16, #tpu.memory_space<vmem>>, vector<11x256xbf16>
    %cst = arith.constant dense<0.000000e+00> : vector<8x256xf32>
    %3 = tpu.matmul %1, %2, %cst {dimension_numbers = #tpu.dot_dimension_numbers<[1], [0], [0], [1], [0, 0, 1, 1], [], []>} : vector<8x11xbf16>, vector<11x256xbf16>, vector<8x256xf32> -> vector<8x256xf32>
    %c0_3 = arith.constant 0 : index
    %c0_4 = arith.constant 0 : index
    %4 = vector.load %arg3[%c0_3, %c0_4] : memref<1x256xf32, #tpu.memory_space<vmem>>, vector<1x256xf32>
    %5 = vector.broadcast %4 : vector<1x256xf32> to vector<8x256xf32>
    %6 = arith.addf %3, %5 : vector<8x256xf32>
    %7 = math.tanh %6 : vector<8x256xf32>
    %8 = arith.truncf %7 : vector<8x256xf32> to vector<8x256xbf16>
    %c0_5 = arith.constant 0 : index
    %c0_6 = arith.constant 0 : index
    %9 = vector.load %arg4[%c0_5, %c0_6] : memref<256x128xbf16, #tpu.memory_space<vmem>>, vector<256x128xbf16>
    %cst_7 = arith.constant dense<0.000000e+00> : vector<8x128xf32>
    %10 = tpu.matmul %8, %9, %cst_7 {dimension_numbers = #tpu.dot_dimension_numbers<[1], [0], [0], [1], [0, 0, 1, 1], [], []>} : vector<8x256xbf16>, vector<256x128xbf16>, vector<8x128xf32> -> vector<8x128xf32>
    %c0_8 = arith.constant 0 : index
    %c0_9 = arith.constant 0 : index
    %11 = vector.load %arg5[%c0_8, %c0_9] : memref<1x128xf32, #tpu.memory_space<vmem>>, vector<1x128xf32>
    %12 = vector.broadcast %11 : vector<1x128xf32> to vector<8x128xf32>
    %13 = arith.addf %10, %12 : vector<8x128xf32>
    %14 = math.tanh %13 : vector<8x128xf32>
    %15 = arith.truncf %14 : vector<8x128xf32> to vector<8x128xbf16>
    %c0_10 = arith.constant 0 : index
    %c0_11 = arith.constant 0 : index
    %16 = vector.load %arg6[%c0_10, %c0_11] : memref<128x32xbf16, #tpu.memory_space<vmem>>, vector<128x32xbf16>
    %cst_12 = arith.constant dense<0.000000e+00> : vector<8x32xf32>
    %17 = tpu.matmul %15, %16, %cst_12 {dimension_numbers = #tpu.dot_dimension_numbers<[1], [0], [0], [1], [0, 0, 1, 1], [], []>} : vector<8x128xbf16>, vector<128x32xbf16>, vector<8x32xf32> -> vector<8x32xf32>
    %c0_13 = arith.constant 0 : index
    %c0_14 = arith.constant 0 : index
    %18 = vector.load %arg7[%c0_13, %c0_14] : memref<1x32xf32, #tpu.memory_space<vmem>>, vector<1x32xf32>
    %19 = vector.broadcast %18 : vector<1x32xf32> to vector<8x32xf32>
    %20 = arith.addf %17, %19 : vector<8x32xf32>
    %21 = math.tanh %20 : vector<8x32xf32>
    %22 = arith.truncf %21 : vector<8x32xf32> to vector<8x32xbf16>
    %c0_15 = arith.constant 0 : index
    %c0_16 = arith.constant 0 : index
    %23 = vector.load %arg8[%c0_15, %c0_16] : memref<32x11xbf16, #tpu.memory_space<vmem>>, vector<32x11xbf16>
    %cst_17 = arith.constant dense<0.000000e+00> : vector<8x11xf32>
    %24 = tpu.matmul %22, %23, %cst_17 {dimension_numbers = #tpu.dot_dimension_numbers<[1], [0], [0], [1], [0, 0, 1, 1], [], []>} : vector<8x32xbf16>, vector<32x11xbf16>, vector<8x11xf32> -> vector<8x11xf32>
    %c0_18 = arith.constant 0 : index
    %c0_19 = arith.constant 0 : index
    %25 = vector.load %arg9[%c0_18, %c0_19] : memref<1x11xf32, #tpu.memory_space<vmem>>, vector<1x11xf32>
    %26 = vector.broadcast %25 : vector<1x11xf32> to vector<8x11xf32>
    %27 = arith.addf %24, %26 : vector<8x11xf32>
    %c0_20 = arith.constant 0 : index
    %c0_21 = arith.constant 0 : index
    %28 = vector.load %arg10[%c0_20, %c0_21] : memref<8x11xf32, #tpu.memory_space<vmem>>, vector<8x11xf32>
    tpu.vector_store %arg10[%c0_20, %c0_21], %27 {strides = array<i32>} : memref<8x11xf32, #tpu.memory_space<vmem>>, vector<8x11xf32>,
    return
  }
  func.func @transform_0(%arg0: i32) -> (i32, i32) {
    %c0_i32 = arith.constant 0 : i32
    %c0_i32_0 = arith.constant 0 : i32
    return %arg0, %c0_i32 : i32, i32
  }
  func.func @transform_1(%arg0: i32) -> (i32, i32) {
    %c0_i32 = arith.constant 0 : i32
    %c0_i32_0 = arith.constant 0 : i32
    %c0_i32_1 = arith.constant 0 : i32
    return %c0_i32, %c0_i32_0 : i32, i32
  }
  func.func @transform_2(%arg0: i32) -> (i32, i32) {
    %c0_i32 = arith.constant 0 : i32
    %c0_i32_0 = arith.constant 0 : i32
    %c0_i32_1 = arith.constant 0 : i32
    return %c0_i32, %c0_i32_0 : i32, i32
  }
  func.func @transform_3(%arg0: i32) -> (i32, i32) {
    %c0_i32 = arith.constant 0 : i32
    %c0_i32_0 = arith.constant 0 : i32
    %c0_i32_1 = arith.constant 0 : i32
    return %c0_i32, %c0_i32_0 : i32, i32
  }
  func.func @transform_4(%arg0: i32) -> (i32, i32) {
    %c0_i32 = arith.constant 0 : i32
    %c0_i32_0 = arith.constant 0 : i32
    %c0_i32_1 = arith.constant 0 : i32
    return %c0_i32, %c0_i32_0 : i32, i32
  }
  func.func @transform_5(%arg0: i32) -> (i32, i32) {
    %c0_i32 = arith.constant 0 : i32
    %c0_i32_0 = arith.constant 0 : i32
    %c0_i32_1 = arith.constant 0 : i32
    return %c0_i32, %c0_i32_0 : i32, i32
  }
  func.func @transform_6(%arg0: i32) -> (i32, i32) {
    %c0_i32 = arith.constant 0 : i32
    %c0_i32_0 = arith.constant 0 : i32
    %c0_i32_1 = arith.constant 0 : i32
    return %c0_i32, %c0_i32_0 : i32, i32
  }
  func.func @transform_7(%arg0: i32) -> (i32, i32) {
    %c0_i32 = arith.constant 0 : i32
    %c0_i32_0 = arith.constant 0 : i32
    %c0_i32_1 = arith.constant 0 : i32
    return %c0_i32, %c0_i32_0 : i32, i32
  }
  func.func @transform_8(%arg0: i32) -> (i32, i32) {
    %c0_i32 = arith.constant 0 : i32
    %c0_i32_0 = arith.constant 0 : i32
    %c0_i32_1 = arith.constant 0 : i32
    return %c0_i32, %c0_i32_0 : i32, i32
  }
  func.func @transform_9(%arg0: i32) -> (i32, i32) {
    %c0_i32 = arith.constant 0 : i32
    %c0_i32_0 = arith.constant 0 : i32
    return %arg0, %c0_i32 : i32, i32
  }
}

</mosaic_0001>

<llo_original>
// kernel: perceptron_forward.1
$region0: #{perceptron_forward.1}
  #allocation0 [shape = 'u32[]', space=smem, size = 0x4, offset = 0x4, fixed_abs, tag = 'smem constant byte address 0x4 - core index']
  #allocation1 [shape = 'u32[72,128]{1,0:T(1,128)}', space=vmem, size = 0x9000, scoped, tag = 'internal scratch']
  %s0 = inlined_call_operand.vmem [shape: f32[24,11], index: 0, kind: input, shape index: {}]
  %s1 = inlined_call_operand.vmem [shape: bf16[11,256], index: 1, kind: input, shape index: {}]
  %s2 = inlined_call_operand.vmem [shape: f32[1,256], index: 2, kind: input, shape index: {}]
  %s3 = inlined_call_operand.vmem [shape: bf16[256,128], index: 3, kind: input, shape index: {}]
  %s4 = inlined_call_operand.vmem [shape: f32[1,128], index: 4, kind: input, shape index: {}]
  %s5 = inlined_call_operand.vmem [shape: bf16[128,32], index: 5, kind: input, shape index: {}]
  %s6 = inlined_call_operand.vmem [shape: f32[1,32], index: 6, kind: input, shape index: {}]
  %s7 = inlined_call_operand.vmem [shape: bf16[32,11], index: 7, kind: input, shape index: {}]
  %s8 = inlined_call_operand.vmem [shape: f32[1,11], index: 8, kind: input, shape index: {}]
  %s9 = inlined_call_operand.vmem [shape: f32[24,11], index: 9, kind: output, shape index: {}]
  %s10 = sld [smem:[#allocation0]]
  $region69: #{perceptron_forward.1} parent=0
    _
  %s12 = ssub.s32 1, %s10
  %s13 = scalar_select 0, %s12, %s10
  loop: start=0, step=1, limit=5
  $region2: #{perceptron_forward.1} parent=0 // loop_pre_header
    _
  $region3: #{perceptron_forward.1} parent=0 // loop_header
    %s15 = sphi 0, %s19
    %p16 = scmp.ge.s32.totalorder %s15, 5
    %s25 = sphi 0, %s27
    %s28 = sphi 0, %s25
    %s29 = sphi 0, %s28
    %s45 = sphi 0, %s29
    %s49 = sphi 0, %s49
    %s51 = sphi 0, %s49
    %s52 = sphi 0, %s51
    %s66 = sphi 0, %s52
    %s70 = sphi 0, %s70
    %s72 = sphi 0, %s70
    %s73 = sphi 0, %s72
    %s87 = sphi 0, %s73
    %s91 = sphi 0, %s91
    %s93 = sphi 0, %s91
    %s94 = sphi 0, %s93
    %s108 = sphi 0, %s94
    %s112 = sphi 0, %s112
    %s114 = sphi 0, %s112
    %s115 = sphi 0, %s114
    %s129 = sphi 0, %s115
    %s133 = sphi 0, %s133
    %s135 = sphi 0, %s133
    %s136 = sphi 0, %s135
    %s150 = sphi 0, %s136
    %s154 = sphi 0, %s154
    %s156 = sphi 0, %s154
    %s157 = sphi 0, %s156
    %s171 = sphi 0, %s157
    %s175 = sphi 0, %s175
    %s177 = sphi 0, %s175
    %s178 = sphi 0, %s177
    %s192 = sphi 0, %s178
    %s196 = sphi 0, %s196
    %s198 = sphi 0, %s196
    %s199 = sphi 0, %s198
    %s213 = sphi 0, %s199
    %s219 = sphi 0, %s221
    %s222 = sphi 0, %s219
    %s223 = sphi 0, %s222
    %s239 = sphi 0, %s223
  $region4: #{perceptron_forward.1} parent=0 // loop_header_branch
    %18 = sbr.rel (%p16) target = $region8
  $region5: #{perceptron_forward.1} parent=0 // loop_body
    %s20 = ssub.s32 %s15, 1
    %s21 = ssub.s32 %s15, 2
    %s22 = sadd.s32 %s15, 1
    %s23 = ssub.s32 %s15, %s22
    %p24 = scmp.eq.s32.totalorder %s23, 0
    %s26 = sadd.s32 %s25, 1
    %s27 = scalar_select %p24, %s25, %s26
    %p30 = pneg %p24
    %p31 = scmp.eq.s32.totalorder %s15, 2
    %p32 = por %p30, %p31
    %p33 = scmp.ne.s32.totalorder %s25, %s28
    %p34 = scmp.eq.s32.totalorder %s15, 0
    %p35 = por %p33, %p34
    %p36 = scmp.ne.s32.totalorder %s25, %s28
    %p37 = scmp.eq.s32.totalorder %s20, 2
    %p38 = por %p36, %p37
    %p39 = scmp.ne.s32.totalorder %s28, %s29
    %p40 = scmp.eq.s32.totalorder %s20, 0
    %p41 = por %p39, %p40
    %p42 = scmp.ne.s32.totalorder %s28, %s29
    %p43 = scmp.eq.s32.totalorder %s21, 2
    %p44 = por %p42, %p43
    %p46 = scmp.ne.s32.totalorder %s29, %s45
    %p47 = scmp.eq.s32.totalorder %s21, 0
    %p48 = por %p46, %p47
    %s50 = sadd.s32 %s49, 1
    %p53 = scmp.eq.s32.totalorder %s15, 2
    %p54 = scmp.ne.s32.totalorder %s49, %s51
    %p55 = scmp.eq.s32.totalorder %s15, 0
    %p56 = por %p54, %p55
    %p57 = scmp.ne.s32.totalorder %s49, %s51
    %p58 = scmp.eq.s32.totalorder %s20, 2
    %p59 = por %p57, %p58
    %p60 = scmp.ne.s32.totalorder %s51, %s52
    %p61 = scmp.eq.s32.totalorder %s20, 0
    %p62 = por %p60, %p61
    %p63 = scmp.ne.s32.totalorder %s51, %s52
    %p64 = scmp.eq.s32.totalorder %s21, 2
    %p65 = por %p63, %p64
    %p67 = scmp.ne.s32.totalorder %s52, %s66
    %p68 = scmp.eq.s32.totalorder %s21, 0
    %p69 = por %p67, %p68
    %s71 = sadd.s32 %s70, 1
    %p74 = scmp.eq.s32.totalorder %s15, 2
    %p75 = scmp.ne.s32.totalorder %s70, %s72
    %p76 = scmp.eq.s32.totalorder %s15, 0
    %p77 = por %p75, %p76
    %p78 = scmp.ne.s32.totalorder %s70, %s72
    %p79 = scmp.eq.s32.totalorder %s20, 2
    %p80 = por %p78, %p79
    %p81 = scmp.ne.s32.totalorder %s72, %s73
    %p82 = scmp.eq.s32.totalorder %s20, 0
    %p83 = por %p81, %p82
    %p84 = scmp.ne.s32.totalorder %s72, %s73
    %p85 = scmp.eq.s32.totalorder %s21, 2
    %p86 = por %p84, %p85
    %p88 = scmp.ne.s32.totalorder %s73, %s87
    %p89 = scmp.eq.s32.totalorder %s21, 0
    %p90 = por %p88, %p89
    %s92 = sadd.s32 %s91, 1
    %p95 = scmp.eq.s32.totalorder %s15, 2
    %p96 = scmp.ne.s32.totalorder %s91, %s93
    %p97 = scmp.eq.s32.totalorder %s15, 0
    %p98 = por %p96, %p97
    %p99 = scmp.ne.s32.totalorder %s91, %s93
    %p100 = scmp.eq.s32.totalorder %s20, 2
    %p101 = por %p99, %p100
    %p102 = scmp.ne.s32.totalorder %s93, %s94
    %p103 = scmp.eq.s32.totalorder %s20, 0
    %p104 = por %p102, %p103
    %p105 = scmp.ne.s32.totalorder %s93, %s94
    %p106 = scmp.eq.s32.totalorder %s21, 2
    %p107 = por %p105, %p106
    %p109 = scmp.ne.s32.totalorder %s94, %s108
    %p110 = scmp.eq.s32.totalorder %s21, 0
    %p111 = por %p109, %p110
    %s113 = sadd.s32 %s112, 1
    %p116 = scmp.eq.s32.totalorder %s15, 2
    %p117 = scmp.ne.s32.totalorder %s112, %s114
    %p118 = scmp.eq.s32.totalorder %s15, 0
    %p119 = por %p117, %p118
    %p120 = scmp.ne.s32.totalorder %s112, %s114
    %p121 = scmp.eq.s32.totalorder %s20, 2
    %p122 = por %p120, %p121
    %p123 = scmp.ne.s32.totalorder %s114, %s115
    %p124 = scmp.eq.s32.totalorder %s20, 0
    %p125 = por %p123, %p124
    %p126 = scmp.ne.s32.totalorder %s114, %s115
    %p127 = scmp.eq.s32.totalorder %s21, 2
    %p128 = por %p126, %p127
    %p130 = scmp.ne.s32.totalorder %s115, %s129
    %p131 = scmp.eq.s32.totalorder %s21, 0
    %p132 = por %p130, %p131
    %s134 = sadd.s32 %s133, 1
    %p137 = scmp.eq.s32.totalorder %s15, 2
    %p138 = scmp.ne.s32.totalorder %s133, %s135
    %p139 = scmp.eq.s32.totalorder %s15, 0
    %p140 = por %p138, %p139
    %p141 = scmp.ne.s32.totalorder %s133, %s135
    %p142 = scmp.eq.s32.totalorder %s20, 2
    %p143 = por %p141, %p142
    %p144 = scmp.ne.s32.totalorder %s135, %s136
    %p145 = scmp.eq.s32.totalorder %s20, 0
    %p146 = por %p144, %p145
    %p147 = scmp.ne.s32.totalorder %s135, %s136
    %p148 = scmp.eq.s32.totalorder %s21, 2
    %p149 = por %p147, %p148
    %p151 = scmp.ne.s32.totalorder %s136, %s150
    %p152 = scmp.eq.s32.totalorder %s21, 0
    %p153 = por %p151, %p152
    %s155 = sadd.s32 %s154, 1
    %p158 = scmp.eq.s32.totalorder %s15, 2
    %p159 = scmp.ne.s32.totalorder %s154, %s156
    %p160 = scmp.eq.s32.totalorder %s15, 0
    %p161 = por %p159, %p160
    %p162 = scmp.ne.s32.totalorder %s154, %s156
    %p163 = scmp.eq.s32.totalorder %s20, 2
    %p164 = por %p162, %p163
    %p165 = scmp.ne.s32.totalorder %s156, %s157
    %p166 = scmp.eq.s32.totalorder %s20, 0
    %p167 = por %p165, %p166
    %p168 = scmp.ne.s32.totalorder %s156, %s157
    %p169 = scmp.eq.s32.totalorder %s21, 2
    %p170 = por %p168, %p169
    %p172 = scmp.ne.s32.totalorder %s157, %s171
    %p173 = scmp.eq.s32.totalorder %s21, 0
    %p174 = por %p172, %p173
    %s176 = sadd.s32 %s175, 1
    %p179 = scmp.eq.s32.totalorder %s15, 2
    %p180 = scmp.ne.s32.totalorder %s175, %s177
    %p181 = scmp.eq.s32.totalorder %s15, 0
    %p182 = por %p180, %p181
    %p183 = scmp.ne.s32.totalorder %s175, %s177
    %p184 = scmp.eq.s32.totalorder %s20, 2
    %p185 = por %p183, %p184
    %p186 = scmp.ne.s32.totalorder %s177, %s178
    %p187 = scmp.eq.s32.totalorder %s20, 0
    %p188 = por %p186, %p187
    %p189 = scmp.ne.s32.totalorder %s177, %s178
    %p190 = scmp.eq.s32.totalorder %s21, 2
    %p191 = por %p189, %p190
    %p193 = scmp.ne.s32.totalorder %s178, %s192
    %p194 = scmp.eq.s32.totalorder %s21, 0
    %p195 = por %p193, %p194
    %s197 = sadd.s32 %s196, 1
    %p200 = scmp.eq.s32.totalorder %s15, 2
    %p201 = scmp.ne.s32.totalorder %s196, %s198
    %p202 = scmp.eq.s32.totalorder %s15, 0
    %p203 = por %p201, %p202
    %p204 = scmp.ne.s32.totalorder %s196, %s198
    %p205 = scmp.eq.s32.totalorder %s20, 2
    %p206 = por %p204, %p205
    %p207 = scmp.ne.s32.totalorder %s198, %s199
    %p208 = scmp.eq.s32.totalorder %s20, 0
    %p209 = por %p207, %p208
    %p210 = scmp.ne.s32.totalorder %s198, %s199
    %p211 = scmp.eq.s32.totalorder %s21, 2
    %p212 = por %p210, %p211
    %p214 = scmp.ne.s32.totalorder %s199, %s213
    %p215 = scmp.eq.s32.totalorder %s21, 0
    %p216 = por %p214, %p215
    %s217 = ssub.s32 %s15, %s22
    %p218 = scmp.eq.s32.totalorder %s217, 0
    %s220 = sadd.s32 %s219, 1
    %s221 = scalar_select %p218, %s219, %s220
    %p224 = pneg %p218
    %p225 = scmp.eq.s32.totalorder %s15, 2
    %p226 = por %p224, %p225
    %p227 = scmp.ne.s32.totalorder %s219, %s222
    %p228 = scmp.eq.s32.totalorder %s15, 0
    %p229 = por %p227, %p228
    %p230 = scmp.ne.s32.totalorder %s219, %s222
    %p231 = scmp.eq.s32.totalorder %s20, 2
    %p232 = por %p230, %p231
    %p233 = scmp.ne.s32.totalorder %s222, %s223
    %p234 = scmp.eq.s32.totalorder %s20, 0
    %p235 = por %p233, %p234
    %p236 = scmp.ne.s32.totalorder %s222, %s223
    %p237 = scmp.eq.s32.totalorder %s21, 2
    %p238 = por %p236, %p237
    %p240 = scmp.ne.s32.totalorder %s223, %s239
    %p241 = scmp.eq.s32.totalorder %s21, 0
    %p242 = por %p240, %p241
    %p243 = scmp.le.s32.totalorder 1, %s15
    %p244 = scmp.lt.s32.totalorder %s15, 4
    %p245 = pnand %p243, %p244
    %p246 = pneg %p245
    // Predicated region
    $region9: #{perceptron_forward.1} parent=5 // pred_check
      _
    $region10: #{perceptron_forward.1} parent=5 // pred_check_branch
      %248 = sbr.rel (%p245) target = $region12
    $region11: #{perceptron_forward.1} parent=5 // pred_region
      %s249 = ssub.s32 %s15, 1
      // Predicated region
      $region13: #{perceptron_forward.1} parent=11 // pred_check
        %p250 = pneg %p62
      $region14: #{perceptron_forward.1} parent=11 // pred_check_branch
        %252 = sbr.rel (%p250) target = $region16
      $region15: #{perceptron_forward.1} parent=11 // pred_region
        _
      $region16: #{perceptron_forward.1} parent=11 // pred_fallthru
        _
      // Predicated region
      $region17: #{perceptron_forward.1} parent=11 // pred_check
        %p253 = pneg %p83
      $region18: #{perceptron_forward.1} parent=11 // pred_check_branch
        %255 = sbr.rel (%p253) target = $region20
      $region19: #{perceptron_forward.1} parent=11 // pred_region
        _
      $region20: #{perceptron_forward.1} parent=11 // pred_fallthru
        _
      // Predicated region
      $region21: #{perceptron_forward.1} parent=11 // pred_check
        %p256 = pneg %p104
      $region22: #{perceptron_forward.1} parent=11 // pred_check_branch
        %258 = sbr.rel (%p256) target = $region24
      $region23: #{perceptron_forward.1} parent=11 // pred_region
        _
      $region24: #{perceptron_forward.1} parent=11 // pred_fallthru
        _
      // Predicated region
      $region25: #{perceptron_forward.1} parent=11 // pred_check
        %p259 = pneg %p125
      $region26: #{perceptron_forward.1} parent=11 // pred_check_branch
        %261 = sbr.rel (%p259) target = $region28
      $region27: #{perceptron_forward.1} parent=11 // pred_region
        _
      $region28: #{perceptron_forward.1} parent=11 // pred_fallthru
        _
      // Predicated region
      $region29: #{perceptron_forward.1} parent=11 // pred_check
        %p262 = pneg %p146
      $region30: #{perceptron_forward.1} parent=11 // pred_check_branch
        %264 = sbr.rel (%p262) target = $region32
      $region31: #{perceptron_forward.1} parent=11 // pred_region
        _
      $region32: #{perceptron_forward.1} parent=11 // pred_fallthru
        _
      // Predicated region
      $region33: #{perceptron_forward.1} parent=11 // pred_check
        %p265 = pneg %p167
      $region34: #{perceptron_forward.1} parent=11 // pred_check_branch
        %267 = sbr.rel (%p265) target = $region36
      $region35: #{perceptron_forward.1} parent=11 // pred_region
        _
      $region36: #{perceptron_forward.1} parent=11 // pred_fallthru
        _
      // Predicated region
      $region37: #{perceptron_forward.1} parent=11 // pred_check
        %p268 = pneg %p188
      $region38: #{perceptron_forward.1} parent=11 // pred_check_branch
        %270 = sbr.rel (%p268) target = $region40
      $region39: #{perceptron_forward.1} parent=11 // pred_region
        _
      $region40: #{perceptron_forward.1} parent=11 // pred_fallthru
        _
      // Predicated region
      $region41: #{perceptron_forward.1} parent=11 // pred_check
        %p271 = pneg %p209
      $region42: #{perceptron_forward.1} parent=11 // pred_check_branch
        %273 = sbr.rel (%p271) target = $region44
      $region43: #{perceptron_forward.1} parent=11 // pred_region
        _
      $region44: #{perceptron_forward.1} parent=11 // pred_fallthru
        _
    $region12: #{perceptron_forward.1} parent=5 // pred_fallthru
      _
    %p274 = scmp.lt.s32.totalorder %s15, 3
    // Predicated region
    $region45: #{perceptron_forward.1} parent=5 // pred_check
      %p275 = pneg %p274
    $region46: #{perceptron_forward.1} parent=5 // pred_check_branch
      %277 = sbr.rel (%p275) target = $region48
    $region47: #{perceptron_forward.1} parent=5 // pred_region
      // Predicated region
      $region49: #{perceptron_forward.1} parent=47 // pred_check
        %p278 = pneg %p35
      $region50: #{perceptron_forward.1} parent=47 // pred_check_branch
        %280 = sbr.rel (%p278) target = $region52
      $region51: #{perceptron_forward.1} parent=47 // pred_region
        %p281 = scmp.lt.s32.totalorder %s15, 2
        %s282 = scalar_select %p281, %s15, 2
        %s283 = smul.addr %s282, 8
        %s284 = scalar_lea.vmem %s0, %s283
      $region52: #{perceptron_forward.1} parent=47 // pred_fallthru
        _
    $region48: #{perceptron_forward.1} parent=5 // pred_fallthru
      _
    %p285 = scmp.le.s32.totalorder 1, %s15
    %p286 = scmp.lt.s32.totalorder %s15, 4
    %p287 = pnand %p285, %p286
    %p288 = pneg %p287
    // Predicated region
    $region53: #{perceptron_forward.1} parent=5 // pred_check
      _
    $region54: #{perceptron_forward.1} parent=5 // pred_check_branch
      %290 = sbr.rel (%p287) target = $region56
    $region55: #{perceptron_forward.1} parent=5 // pred_region
      %s291 = ssub.s32 %s15, 1
      %p292 = scmp.lt.s32.totalorder %s20, 2
      %s293 = scalar_select %p292, %s20, 2
      %s294 = smul.addr %s293, 8
      %s295 = scalar_lea.vmem %s0, %s294
      %p296 = pneg %p41
      %p297 = pneg %p38
      %p298 = pneg %p62
      %p299 = pneg %p59
      %p300 = pneg %p83
      %p301 = pneg %p80
      %p302 = pneg %p104
      %p303 = pneg %p101
      %p304 = pneg %p125
      %p305 = pneg %p122
      %p306 = pneg %p146
      %p307 = pneg %p143
      %p308 = pneg %p167
      %p309 = pneg %p164
      %p310 = pneg %p188
      %p311 = pneg %p185
      %p312 = pneg %p209
      %p313 = pneg %p206
      %p314 = pneg %p235
      %p315 = pneg %p232
      %p316 = scmp.lt.s32.totalorder %s20, 2
      %s317 = scalar_select %p316, %s20, 2
      %s318 = smul.addr %s317, 8
      %s319 = scalar_lea.vmem %s9, %s318
      %p320 = scmp.lt.s32.totalorder %s20, 2
      %s321 = scalar_select %p320, %s20, 2
      %s322 = smul.addr %s321, 8
      %s323 = scalar_lea.vmem %s0, %s322
      %p324 = scmp.lt.s32.totalorder %s20, 2
      %s325 = scalar_select %p324, %s20, 2
      %s326 = smul.addr %s325, 8
      %s327 = scalar_lea.vmem %s9, %s326
      %v329 = vld [vmem:[%s323] sm:$0xff]
      %v330 = vpack.c.bf16 %v329, %v329
      %v331 = vld [vmem:[%s1] sm:$0xff]
      %v332 = vld [vmem:[%s1 + $0x8] sm:$0x33]
      %v333 = vld [vmem:[%s2] sm:$0x3]
      %v335 = vperm.slane %v333, 0
      %v336 = vperm.slane %v333, 1
      %v341 = vunpack.c.l.b16 %v331
      %v342 = vunpack.c.h.b16 %v331
      %v343 = vunpack.c.l.b16 %v332
      %v344 = vunpack.c.h.b16 %v332
      %v345 = vpack.c.b16 %v343, %v341
      %v346 = vpack.c.b16 %v344, %v342
      %vm347 = vcmask 89088
      %v349 = vsel %vm347, %v330, 0
      %vm351 = vcmask 1044480
      %vm352 = vcmask 1045504
      %v353 = vsel %vm351, 4294967295, 65535
      %v354 = vsel %vm352, %v353, 0
      %v356 = vand.u32 %v345, %v354
      %v359 = vand.u32 %v346, %v354
      %361 = vmatpush.bf16.msra.mxu0 0
      %362 = vmatpush.bf16.msra.mxu0 0
      %363 = vmatpush.bf16.msra.mxu0 0
      %364 = vmatpush.bf16.msra.mxu0 0
      %365 = vmatpush.bf16.msra.mxu0 0
      %366 = vmatpush.bf16.msra.mxu0 0
      %367 = vmatpush.bf16.msra.mxu0 0
      %368 = vmatpush.bf16.msra.mxu0 %v356
      %369 = vmatmul.bf16.gmra.mxu0 %v349
      %v370 = vpop.f32.mrf.mxu0
      %v371 = vadd.f32 %v335, %v370
      %v372 = vpop.f32.mrf.mxu0
      %373 = vdwg.mxu0
      %374 = vmatpush.bf16.msra.mxu0 0
      %375 = vmatpush.bf16.msra.mxu0 0
      %376 = vmatpush.bf16.msra.mxu0 0
      %377 = vmatpush.bf16.msra.mxu0 0
      %378 = vmatpush.bf16.msra.mxu0 0
      %379 = vmatpush.bf16.msra.mxu0 0
      %380 = vmatpush.bf16.msra.mxu0 0
      %381 = vmatpush.bf16.msra.mxu0 %v359
      %382 = vmatmul.bf16.gmra.mxu0 %v349
      %v383 = vpop.f32.mrf.mxu0
      %v384 = vadd.f32 %v336, %v383
      %v385 = vpop.f32.mrf.mxu0
      %386 = vdwg.mxu0
      %v387 = vtanh.pop %v371
      %v388 = vtanh.pop %v384
      %v389 = vpack.c.bf16 %v387, %v387
      %v390 = vpack.c.bf16 %v388, %v388
      %v391 = vld [vmem:[%s3] sm:$0xf]
      %v392 = vld [vmem:[%s3 + $0x4] sm:$0xf]
      %v393 = vld [vmem:[%s3 + $0x8] sm:$0xf]
      %v394 = vld [vmem:[%s3 + $0xc] sm:$0xf]
      %v395 = vld [vmem:[%s3 + $0x10] sm:$0xf]
      %v396 = vld [vmem:[%s3 + $0x14] sm:$0xf]
      %v397 = vld [vmem:[%s3 + $0x18] sm:$0xf]
      %v398 = vld [vmem:[%s3 + $0x1c] sm:$0xf]
      %v399 = vld [vmem:[%s3 + $0x20] sm:$0xf]
      %v400 = vld [vmem:[%s3 + $0x24] sm:$0xf]
      %v401 = vld [vmem:[%s3 + $0x28] sm:$0xf]
      %v402 = vld [vmem:[%s3 + $0x2c] sm:$0xf]
      %v403 = vld [vmem:[%s3 + $0x30] sm:$0xf]
      %v404 = vld [vmem:[%s3 + $0x34] sm:$0xf]
      %v405 = vld [vmem:[%s3 + $0x38] sm:$0xf]
      %v406 = vld [vmem:[%s3 + $0x3c] sm:$0xf]
      %v407 = vld [vmem:[%s3 + $0x40] sm:$0xf]
      %v408 = vld [vmem:[%s3 + $0x44] sm:$0xf]
      %v409 = vld [vmem:[%s3 + $0x48] sm:$0xf]
      %v410 = vld [vmem:[%s3 + $0x4c] sm:$0xf]
      %v411 = vld [vmem:[%s3 + $0x50] sm:$0xf]
      %v412 = vld [vmem:[%s3 + $0x54] sm:$0xf]
      %v413 = vld [vmem:[%s3 + $0x58] sm:$0xf]
      %v414 = vld [vmem:[%s3 + $0x5c] sm:$0xf]
      %v415 = vld [vmem:[%s3 + $0x60] sm:$0xf]
      %v416 = vld [vmem:[%s3 + $0x64] sm:$0xf]
      %v417 = vld [vmem:[%s3 + $0x68] sm:$0xf]
      %v418 = vld [vmem:[%s3 + $0x6c] sm:$0xf]
      %v419 = vld [vmem:[%s3 + $0x70] sm:$0xf]
      %v420 = vld [vmem:[%s3 + $0x74] sm:$0xf]
      %v421 = vld [vmem:[%s3 + $0x78] sm:$0xf]
      %v422 = vld [vmem:[%s3 + $0x7c] sm:$0xf]
      %v423 = vld [vmem:[%s4] sm:$0x1]
      %v425 = vperm.slane %v423, 0
      %v459 = vunpack.c.l.b16 %v391
      %v460 = vunpack.c.l.b16 %v392
      %v461 = vunpack.c.l.b16 %v393
      %v462 = vunpack.c.l.b16 %v394
      %v463 = vunpack.c.l.b16 %v395
      %v464 = vunpack.c.l.b16 %v396
      %v465 = vunpack.c.l.b16 %v397
      %v466 = vunpack.c.l.b16 %v398
      %v467 = vunpack.c.l.b16 %v399
      %v468 = vunpack.c.l.b16 %v400
      %v469 = vunpack.c.l.b16 %v401
      %v470 = vunpack.c.l.b16 %v402
      %v471 = vunpack.c.l.b16 %v403
      %v472 = vunpack.c.l.b16 %v404
      %v473 = vunpack.c.l.b16 %v405
      %v474 = vunpack.c.l.b16 %v406
      %v475 = vunpack.c.l.b16 %v407
      %v476 = vunpack.c.l.b16 %v408
      %v477 = vunpack.c.l.b16 %v409
      %v478 = vunpack.c.l.b16 %v410
      %v479 = vunpack.c.l.b16 %v411
      %v480 = vunpack.c.l.b16 %v412
      %v481 = vunpack.c.l.b16 %v413
      %v482 = vunpack.c.l.b16 %v414
      %v483 = vunpack.c.l.b16 %v415
      %v484 = vunpack.c.l.b16 %v416
      %v485 = vunpack.c.l.b16 %v417
      %v486 = vunpack.c.l.b16 %v418
      %v487 = vunpack.c.l.b16 %v419
      %v488 = vunpack.c.l.b16 %v420
      %v489 = vunpack.c.l.b16 %v421
      %v490 = vunpack.c.l.b16 %v422
      %v491 = vpack.c.b16 %v460, %v459
      %v492 = vpack.c.b16 %v462, %v461
      %v493 = vpack.c.b16 %v464, %v463
      %v494 = vpack.c.b16 %v466, %v465
      %v495 = vpack.c.b16 %v468, %v467
      %v496 = vpack.c.b16 %v470, %v469
      %v497 = vpack.c.b16 %v472, %v471
      %v498 = vpack.c.b16 %v474, %v473
      %v499 = vpack.c.b16 %v476, %v475
      %v500 = vpack.c.b16 %v478, %v477
      %v501 = vpack.c.b16 %v480, %v479
      %v502 = vpack.c.b16 %v482, %v481
      %v503 = vpack.c.b16 %v484, %v483
      %v504 = vpack.c.b16 %v486, %v485
      %v505 = vpack.c.b16 %v488, %v487
      %v506 = vpack.c.b16 %v490, %v489
      %523 = vmatpush.bf16.msra.mxu0 %v498
      %524 = vmatpush.bf16.msra.mxu0 %v497
      %525 = vmatpush.bf16.msra.mxu0 %v496
      %526 = vmatpush.bf16.msra.mxu0 %v495
      %527 = vmatpush.bf16.msra.mxu0 %v494
      %528 = vmatpush.bf16.msra.mxu0 %v493
      %529 = vmatpush.bf16.msra.mxu0 %v492
      %530 = vmatpush.bf16.msra.mxu0 %v491
      %531 = vmatmul.bf16.gmra.mxu0 %v389
      %v532 = vpop.f32.mrf.mxu0
      %v533 = vadd.f32 %v425, %v532
      %v534 = vpop.f32.mrf.mxu0
      %535 = vdwg.mxu0
      %536 = vmatpush.bf16.msra.mxu0 %v506
      %537 = vmatpush.bf16.msra.mxu0 %v505
      %538 = vmatpush.bf16.msra.mxu0 %v504
      %539 = vmatpush.bf16.msra.mxu0 %v503
      %540 = vmatpush.bf16.msra.mxu0 %v502
      %541 = vmatpush.bf16.msra.mxu0 %v501
      %542 = vmatpush.bf16.msra.mxu0 %v500
      %543 = vmatpush.bf16.msra.mxu0 %v499
      %544 = vmatmul.bf16.gmra.mxu0 %v390
      %v545 = vpop.f32.mrf.mxu0
      %v546 = vadd.f32 %v533, %v545
      %v547 = vpop.f32.mrf.mxu0
      %548 = vdwg.mxu0
      %v549 = vtanh.pop %v546
      %v550 = vpack.c.bf16 %v549, %v549
      %v551 = vld [vmem:[%s5] sm:$0xf]
      %v552 = vld [vmem:[%s5 + $0x4] sm:$0xf]
      %v553 = vld [vmem:[%s5 + $0x8] sm:$0xf]
      %v554 = vld [vmem:[%s5 + $0xc] sm:$0xf]
      %v555 = vld [vmem:[%s5 + $0x10] sm:$0xf]
      %v556 = vld [vmem:[%s5 + $0x14] sm:$0xf]
      %v557 = vld [vmem:[%s5 + $0x18] sm:$0xf]
      %v558 = vld [vmem:[%s5 + $0x1c] sm:$0xf]
      %v559 = vld [vmem:[%s5 + $0x20] sm:$0xf]
      %v560 = vld [vmem:[%s5 + $0x24] sm:$0xf]
      %v561 = vld [vmem:[%s5 + $0x28] sm:$0xf]
      %v562 = vld [vmem:[%s5 + $0x2c] sm:$0xf]
      %v563 = vld [vmem:[%s5 + $0x30] sm:$0xf]
      %v564 = vld [vmem:[%s5 + $0x34] sm:$0xf]
      %v565 = vld [vmem:[%s5 + $0x38] sm:$0xf]
      %v566 = vld [vmem:[%s5 + $0x3c] sm:$0xf]
      %v567 = vld [vmem:[%s6] sm:$0x1]
      %v569 = vperm.slane %v567, 0
      %v587 = vunpack.c.l.b16 %v551
      %v588 = vunpack.c.l.b16 %v552
      %v589 = vunpack.c.l.b16 %v553
      %v590 = vunpack.c.l.b16 %v554
      %v591 = vunpack.c.l.b16 %v555
      %v592 = vunpack.c.l.b16 %v556
      %v593 = vunpack.c.l.b16 %v557
      %v594 = vunpack.c.l.b16 %v558
      %v595 = vunpack.c.l.b16 %v559
      %v596 = vunpack.c.l.b16 %v560
      %v597 = vunpack.c.l.b16 %v561
      %v598 = vunpack.c.l.b16 %v562
      %v599 = vunpack.c.l.b16 %v563
      %v600 = vunpack.c.l.b16 %v564
      %v601 = vunpack.c.l.b16 %v565
      %v602 = vunpack.c.l.b16 %v566
      %v603 = vpack.c.b16 %v588, %v587
      %v604 = vpack.c.b16 %v590, %v589
      %v605 = vpack.c.b16 %v592, %v591
      %v606 = vpack.c.b16 %v594, %v593
      %v607 = vpack.c.b16 %v596, %v595
      %v608 = vpack.c.b16 %v598, %v597
      %v609 = vpack.c.b16 %v600, %v599
      %v610 = vpack.c.b16 %v602, %v601
      %619 = vmatpush.bf16.msra.mxu0 %v610
      %620 = vmatpush.bf16.msra.mxu0 %v609
      %621 = vmatpush.bf16.msra.mxu0 %v608
      %622 = vmatpush.bf16.msra.mxu0 %v607
      %623 = vmatpush.bf16.msra.mxu0 %v606
      %624 = vmatpush.bf16.msra.mxu0 %v605
      %625 = vmatpush.bf16.msra.mxu0 %v604
      %626 = vmatpush.bf16.msra.mxu0 %v603
      %627 = vmatmul.bf16.gmra.mxu0 %v550
      %v628 = vpop.f32.mrf.mxu0
      %v629 = vadd.f32 %v569, %v628
      %v630 = vpop.f32.mrf.mxu0
      %631 = vdwg.mxu0
      %v632 = vtanh.pop %v629
      %v633 = vpack.c.bf16 %v632, %v632
      %v634 = vld [vmem:[%s7] sm:$0xf]
      %v635 = vld [vmem:[%s7 + $0x4] sm:$0xf]
      %v636 = vld [vmem:[%s7 + $0x8] sm:$0xf]
      %v637 = vld [vmem:[%s7 + $0xc] sm:$0xf]
      %v638 = vld [vmem:[%s8] sm:$0x1]
      %v640 = vperm.slane %v638, 0
      %v646 = vunpack.c.l.b16 %v634
      %v647 = vunpack.c.l.b16 %v635
      %v648 = vunpack.c.l.b16 %v636
      %v649 = vunpack.c.l.b16 %v637
      %v650 = vpack.c.b16 %v647, %v646
      %v651 = vpack.c.b16 %v649, %v648
      %vm654 = vcmask 261120
      %v656 = vsel %vm654, %v633, 0
      %658 = vmatpush.bf16.msra.mxu0 0
      %659 = vmatpush.bf16.msra.mxu0 0
      %660 = vmatpush.bf16.msra.mxu0 0
      %661 = vmatpush.bf16.msra.mxu0 0
      %662 = vmatpush.bf16.msra.mxu0 0
      %663 = vmatpush.bf16.msra.mxu0 0
      %664 = vmatpush.bf16.msra.mxu0 %v651
      %665 = vmatpush.bf16.msra.mxu0 %v650
      %666 = vmatmul.bf16.gmra.mxu0 %v656
      %v667 = vpop.f32.mrf.mxu0
      %v668 = vadd.f32 %v640, %v667
      %v669 = vpop.f32.mrf.mxu0
      %670 = vdwg.mxu0
      %671 = vst.msk [vmem:[%s327] sm:$0xff] %vm347, %v668
      %p672 = scmp.lt.s32.totalorder %s20, 2
      %s673 = scalar_select %p672, %s20, 2
      %s674 = smul.addr %s673, 8
      %s675 = scalar_lea.vmem %s9, %s674
      // Predicated region
      $region57: #{perceptron_forward.1} parent=55 // pred_check
        %p676 = pneg %p232
      $region58: #{perceptron_forward.1} parent=55 // pred_check_branch
        %678 = sbr.rel (%p676) target = $region60
      $region59: #{perceptron_forward.1} parent=55 // pred_region
        _
      $region60: #{perceptron_forward.1} parent=55 // pred_fallthru
        _
    $region56: #{perceptron_forward.1} parent=5 // pred_fallthru
      _
    %p679 = scmp.le.s32.totalorder 2, %s15
    // Predicated region
    $region61: #{perceptron_forward.1} parent=5 // pred_check
      %p680 = pneg %p679
    $region62: #{perceptron_forward.1} parent=5 // pred_check_branch
      %682 = sbr.rel (%p680) target = $region64
    $region63: #{perceptron_forward.1} parent=5 // pred_region
      %s683 = ssub.s32 %s15, 2
      // Predicated region
      $region65: #{perceptron_forward.1} parent=63 // pred_check
        %p684 = pneg %p238
      $region66: #{perceptron_forward.1} parent=63 // pred_check_branch
        %686 = sbr.rel (%p684) target = $region68
      $region67: #{perceptron_forward.1} parent=63 // pred_region
        %p687 = scmp.lt.s32.totalorder %s21, 2
        %s688 = scalar_select %p687, %s21, 2
        %s689 = smul.addr %s688, 8
        %s690 = scalar_lea.vmem %s9, %s689
      $region68: #{perceptron_forward.1} parent=63 // pred_fallthru
        _
    $region64: #{perceptron_forward.1} parent=5 // pred_fallthru
      _
  $region6: #{perceptron_forward.1} parent=0 // loop_footer
    %s19 = sadd.s32 1, %s15
  $region7: #{perceptron_forward.1} parent=0 // loop_footer_branch
    %14 = sbr.rel target = $region3
  $region8: #{perceptron_forward.1} parent=0 // loop_exit
    _

</llo_original>
